<compile_context>
chip_gen: v5e
topology: v5e:2x2
jax: 0.10.0
libtpu: 0.0.40
codegen_flags: <defaults>
</compile_context>

<pallas_src>
import jax
import jax.numpy as jnp
from jax.experimental import pallas as pl
from jax.experimental.pallas import tpu as pltpu


LANES = 128          # lane width of a vreg; packing target for the last dim
_TB_PACKED = 2048    # packed rows per tile -> 2048*128*4 B = 1 MiB per x tile


def _packed_linear_kernel(x_ref, w_ref, o_ref):
    # x_ref: (TB, 128) lane-dense input tile
    # w_ref: (128, 128) block-diagonal weight (32 copies of W^T), VMEM-resident
    # o_ref: (TB, 128) lane-dense output tile -> full-width unmasked stores
    o_ref[...] = jnp.dot(
        x_ref[...], w_ref[...], preferred_element_type=jnp.float32
    ).astype(o_ref.dtype)


def simple_linear(x: jax.Array, weight: jax.Array) -> jax.Array:
    """y = x @ weight.T (no bias), matching torch.nn.Linear(4, 4, bias=False)."""
    B, IN = x.shape
    OUT, IN_w = weight.shape
    assert IN == IN_w
    assert LANES % IN == 0, "lane-packing assumes in_features divides 128"

    pack = LANES // IN          # original rows packed per lane-dense row (32)
    in_lanes = pack * IN        # 128
    out_lanes = pack * OUT      # 128 for OUT=4

    # Block-diagonal weight: pack copies of W^T on the diagonal (~64 KiB).
    # Constant-folds under jit when the weight is a compile-time constant.
    w_block = jnp.kron(jnp.eye(pack, dtype=x.dtype), weight.T.astype(x.dtype))

    # Pad batch to a multiple of `pack`, then lane-pack: (Bp, IN) -> (R, 128).
    # Row-major f32 reshape is a free bitcast (no data movement).
    Bp = pl.cdiv(B, pack) * pack
    x_pad = x if Bp == B else jnp.pad(x, ((0, Bp - B), (0, 0)))
    R = Bp // pack
    x_packed = x_pad.reshape(R, in_lanes)

    if R <= _TB_PACKED:
        # Small path (<= ~1 MiB packed): whole arrays in VMEM, single MXU pass,
        # no pipeline prologue/epilogue.
        y_packed = pl.pallas_call(
            _packed_linear_kernel,
            out_shape=jax.ShapeDtypeStruct((R, out_lanes), x.dtype),
            in_specs=[
                pl.BlockSpec(memory_space=pltpu.MemorySpace.VMEM),
                pl.BlockSpec(memory_space=pltpu.MemorySpace.VMEM),
            ],
            out_specs=pl.BlockSpec(memory_space=pltpu.MemorySpace.VMEM),
        )(x_packed, w_block)
    else:
        # Batch-tiled path: ~1 MiB lane-dense DMAs per step, weight fetched
        # once (constant index_map) and resident across steps, partial last
        # block handled by Pallas masking (row-independent op, so safe).
        grid = (pl.cdiv(R, _TB_PACKED),)
        y_packed = pl.pallas_call(
            _packed_linear_kernel,
            out_shape=jax.ShapeDtypeStruct((R, out_lanes), x.dtype),
            grid_spec=pl.GridSpec(
                grid=grid,
                in_specs=[
                    pl.BlockSpec((_TB_PACKED, in_lanes), lambda i: (i, 0)),
                    pl.BlockSpec((in_lanes, out_lanes), lambda i: (0, 0)),
                ],
                out_specs=pl.BlockSpec((_TB_PACKED, out_lanes), lambda i: (i, 0)),
            ),
            compiler_params=pltpu.CompilerParams(
                dimension_semantics=("parallel",),
            ),
        )(x_packed, w_block)

    # Unpack lanes back to (Bp, OUT) and drop padding rows.
    return y_packed.reshape(Bp, OUT)[:B]


if __name__ == "__main__":
    key = jax.random.PRNGKey(0)
    k_x, k_w, k_xl = jax.random.split(key, 3)

    # Shapes consistent with the module: in_features = out_features = 4.
    B, IN, OUT = 8, 4, 4

    x = jax.random.normal(k_x, (B, IN), dtype=jnp.float32)
    # Deterministic weight init mimicking torch's uniform(-1/sqrt(in), 1/sqrt(in)).
    bound = 1.0 / jnp.sqrt(jnp.float32(IN))
    weight = jax.random.uniform(
        k_w, (OUT, IN), dtype=jnp.float32, minval=-bound, maxval=bound
    )

    # Small path (module's native regime, B=8).
    y = simple_linear(x, weight)
    jax.block_until_ready(y)
    y_ref = x @ weight.T
    assert jnp.allclose(y, y_ref, atol=1e-5, rtol=1e-5)

    # Batch-tiled path: non-multiple batch exercises pl.cdiv grid, partial
    # last block masking, and the pad/slice around lane-packing.
    B_large = 70000  # -> 2188 packed rows -> grid=(2,), partial second block
    x_large = jax.random.normal(k_xl, (B_large, IN), dtype=jnp.float32)
    y_large = simple_linear(x_large, weight)
    jax.block_until_ready(y_large)
    y_large_ref = x_large @ weight.T
    assert y_large.shape == (B_large, OUT)
    assert jnp.allclose(y_large, y_large_ref, atol=1e-5, rtol=1e-5)

    print("KERNEL_OK")
</pallas_src>

<mosaic_0001>
module attributes {stable_mosaic.version = 11 : i64} {
  func.func @_packed_linear_kernel(%arg0: memref<1x128xf32, #tpu.memory_space<vmem>>, %arg1: memref<128x128xf32, #tpu.memory_space<vmem>>, %arg2: memref<1x128xf32, #tpu.memory_space<vmem>>) attributes {dimension_semantics = [], scalar_prefetch = 0 : i64, scratch_operands = 0 : i64, tpu.core_type = #tpu.core_type<tc>} {
    %c0 = arith.constant 0 : index
    %c0_0 = arith.constant 0 : index
    %0 = vector.load %arg0[%c0, %c0_0] : memref<1x128xf32, #tpu.memory_space<vmem>>, vector<1x128xf32>
    %c0_1 = arith.constant 0 : index
    %c0_2 = arith.constant 0 : index
    %1 = vector.load %arg1[%c0_1, %c0_2] : memref<128x128xf32, #tpu.memory_space<vmem>>, vector<128x128xf32>
    %cst = arith.constant dense<0.000000e+00> : vector<1x128xf32>
    %2 = tpu.matmul %0, %1, %cst {dimension_numbers = #tpu.dot_dimension_numbers<[1], [0], [0], [1], [0, 0, 1, 1], [], []>} : vector<1x128xf32>, vector<128x128xf32>, vector<1x128xf32> -> vector<1x128xf32>
    %c0_3 = arith.constant 0 : index
    %c0_4 = arith.constant 0 : index
    %3 = vector.load %arg2[%c0_3, %c0_4] : memref<1x128xf32, #tpu.memory_space<vmem>>, vector<1x128xf32>
    tpu.vector_store %arg2[%c0_3, %c0_4], %2 {strides = array<i32>} : memref<1x128xf32, #tpu.memory_space<vmem>>, vector<1x128xf32>,
    return
  }
}

</mosaic_0001>

<llo_original>
// kernel: tpu_custom_call.1
$region0: #{tpu_custom_call.1}
  #allocation0 [shape = 'u32[]', space=smem, size = 0x4, offset = 0x4, fixed_abs, tag = 'smem constant byte address 0x4 - core index']
  #allocation1 [shape = 'u32[72,128]{1,0:T(1,128)}', space=vmem, size = 0x9000, scoped, tag = 'internal scratch']
  %s0 = inlined_call_operand.hbm [shape: f32[1,128], index: 0, kind: input, shape index: {}]
  %s1 = inlined_call_operand.hbm [shape: f32[128,128], index: 1, kind: input, shape index: {}]
  %s2 = inlined_call_operand.hbm [shape: f32[1,128], index: 2, kind: output, shape index: {}]
  %s3 = sld [smem:[#allocation0]]
  $region26: #{tpu_custom_call.1} parent=0
    _
  %s5 = ssub.s32 1, %s3
  %s6 = scalar_select 0, %s5, %s3
  $region1: #{tpu_custom_call.1} parent=0
    #allocation2 [shape = 'u8[512]{0}', space=vmem, size = 0x400, scoped, tag = 'input window, operand 0, single buffered']
    #allocation3 [shape = 's32[1]{0}', space=sflag, size = 0x4, scoped, tag = 'scoped memory for tpu_custom_call.1']
    #allocation4 [shape = 's32[1]{0}', space=sflag, size = 0x4, scoped, tag = 'scoped memory for tpu_custom_call.1']
    #allocation5 [shape = 'u8[65536]{0}', space=vmem, size = 0x10000, scoped, tag = 'input window, operand 1, single buffered']
    #allocation6 [shape = 's32[1]{0}', space=sflag, size = 0x4, scoped, tag = 'scoped memory for tpu_custom_call.1']
    #allocation7 [shape = 'u8[512]{0}', space=vmem, size = 0x400, scoped, tag = 'output window, operand 0, single buffered']
    %7 = vsyncpa [#allocation3], 0
    %8 = vsyncpa [#allocation6], 0
    %9 = vsyncpa [#allocation4], 0
    // Predicated region
    $region2: #{tpu_custom_call.1} parent=1 // pred_check
      _
    $region3: #{tpu_custom_call.1} parent=1 // pred_check_branch
      %11 = sbr.rel (0) target = $region5
    $region4: #{tpu_custom_call.1} parent=1 // pred_region
      %13 = vsyncadd [#allocation3], 0
      %s15 = sshll.u32 %s0, 4
      %s16 = int_to_ptr.hbm [resolvable:$true] %s15
      %s17 = sshll.u32 [#allocation2], 4
      %s18 = int_to_ptr.vmem [resolvable:$true] %s17
      %20 = dma.hbm_to_vmem [thread:$0]  %s16, 16, %s18, [#allocation3]
    $region5: #{tpu_custom_call.1} parent=1 // pred_fallthru
      _
    // Predicated region
    $region6: #{tpu_custom_call.1} parent=1 // pred_check
      _
    $region7: #{tpu_custom_call.1} parent=1 // pred_check_branch
      %22 = sbr.rel (0) target = $region9
    $region8: #{tpu_custom_call.1} parent=1 // pred_region
      %24 = vsyncadd [#allocation6], 0
      %s25 = sshll.u32 %s1, 4
      %s26 = int_to_ptr.hbm [resolvable:$true] %s25
      %s27 = sshll.u32 [#allocation5], 4
      %s28 = int_to_ptr.vmem [resolvable:$true] %s27
      %33 = dma.hbm_to_vmem [thread:$0]  %s26, 2048, %s28, [#allocation6], 128, 128, 8
    $region9: #{tpu_custom_call.1} parent=1 // pred_fallthru
      _
    // Predicated region
    $region10: #{tpu_custom_call.1} parent=1 // pred_check
      _
    $region11: #{tpu_custom_call.1} parent=1 // pred_check_branch
      %35 = sbr.rel (0) target = $region13
    $region12: #{tpu_custom_call.1} parent=1 // pred_region
      %37 = dma.done [#allocation3], 16
    $region13: #{tpu_custom_call.1} parent=1 // pred_fallthru
      _
    // Predicated region
    $region14: #{tpu_custom_call.1} parent=1 // pred_check
      _
    $region15: #{tpu_custom_call.1} parent=1 // pred_check_branch
      %39 = sbr.rel (0) target = $region17
    $region16: #{tpu_custom_call.1} parent=1 // pred_region
      %41 = dma.done [#allocation6], 2048
    $region17: #{tpu_custom_call.1} parent=1 // pred_fallthru
      _
    %v42 = vld [vmem:[#allocation2] sm:$0x1]
    %v43 = vld [vmem:[#allocation5] sm:$0xff]
    %v44 = vld [vmem:[#allocation5 + $0x8] sm:$0xff]
    %v45 = vld [vmem:[#allocation5 + $0x10] sm:$0xff]
    %v46 = vld [vmem:[#allocation5 + $0x18] sm:$0xff]
    %v47 = vld [vmem:[#allocation5 + $0x20] sm:$0xff]
    %v48 = vld [vmem:[#allocation5 + $0x28] sm:$0xff]
    %v49 = vld [vmem:[#allocation5 + $0x30] sm:$0xff]
    %v50 = vld [vmem:[#allocation5 + $0x38] sm:$0xff]
    %v51 = vld [vmem:[#allocation5 + $0x40] sm:$0xff]
    %v52 = vld [vmem:[#allocation5 + $0x48] sm:$0xff]
    %v53 = vld [vmem:[#allocation5 + $0x50] sm:$0xff]
    %v54 = vld [vmem:[#allocation5 + $0x58] sm:$0xff]
    %v55 = vld [vmem:[#allocation5 + $0x60] sm:$0xff]
    %v56 = vld [vmem:[#allocation5 + $0x68] sm:$0xff]
    %v57 = vld [vmem:[#allocation5 + $0x70] sm:$0xff]
    %v58 = vld [vmem:[#allocation5 + $0x78] sm:$0xff]
    %59 = vmatpush.msra.mxu0 %v58
    %60 = vmatpush.msra.mxu0 %v57
    %61 = vmatpush.msra.mxu0 %v56
    %62 = vmatpush.msra.mxu0 %v55
    %63 = vmatpush.msra.mxu0 %v54
    %64 = vmatpush.msra.mxu0 %v53
    %65 = vmatpush.msra.mxu0 %v52
    %66 = vmatpush.msra.mxu0 %v51
    %67 = vmatpush.msra.mxu0 %v50
    %68 = vmatpush.msra.mxu0 %v49
    %69 = vmatpush.msra.mxu0 %v48
    %70 = vmatpush.msra.mxu0 %v47
    %71 = vmatpush.msra.mxu0 %v46
    %72 = vmatpush.msra.mxu0 %v45
    %73 = vmatpush.msra.mxu0 %v44
    %74 = vmatpush.msra.mxu0 %v43
    %75 = vmatmul.f32.gmra.mxu0 %v42
    %v76 = vpop.f32.mrf.mxu0
    %v77 = vadd.f32 0.0, %v76
    %78 = vdwg.mxu0
    %79 = vst [vmem:[#allocation7] sm:$0x1] %v77
    // Predicated region
    $region18: #{tpu_custom_call.1} parent=1 // pred_check
      _
    $region19: #{tpu_custom_call.1} parent=1 // pred_check_branch
      %81 = sbr.rel (0) target = $region21
    $region20: #{tpu_custom_call.1} parent=1 // pred_region
      %83 = vsyncadd [#allocation4], 0
      %s85 = sshll.u32 [#allocation7], 4
      %s86 = int_to_ptr.vmem [resolvable:$true] %s85
      %s87 = sshll.u32 %s2, 4
      %s88 = int_to_ptr.hbm [resolvable:$true] %s87
      %90 = dma.vmem_to_hbm [thread:$0]  %s86, 16, %s88, [#allocation4]
    $region21: #{tpu_custom_call.1} parent=1 // pred_fallthru
      _
    // Predicated region
    $region22: #{tpu_custom_call.1} parent=1 // pred_check
      _
    $region23: #{tpu_custom_call.1} parent=1 // pred_check_branch
      %92 = sbr.rel (0) target = $region25
    $region24: #{tpu_custom_call.1} parent=1 // pred_region
      %94 = dma.done [#allocation4], 16
    $region25: #{tpu_custom_call.1} parent=1 // pred_fallthru
      _
    %95 = vsyncpa [#allocation3], 1
    %96 = vsyncpa [#allocation6], 1
    %97 = vsyncpa [#allocation4], 1

</llo_original>
